<compile_context>
chip_gen: v7x
topology: tpu7x:2x2x1
jax: 0.10.0
libtpu: 0.0.40
codegen_flags: <defaults>
</compile_context>

<pallas_src>
import functools

import jax
import jax.numpy as jnp
from jax.experimental import pallas as pl
from jax.experimental.pallas import tpu as pltpu


def _round_up(a, m):
    return (a + m - 1) // m * m


def _vmem_padded_bytes(shape, dtype):
    """Bytes a VMEM tile of `shape` really occupies after (sublane, lane) padding."""
    itemsize = jnp.dtype(dtype).itemsize
    sub_mult = 8 * max(1, 4 // itemsize)          # f32: 8, bf16: 16, int8: 32
    if len(shape) == 1:
        return _round_up(shape[0], 128) * itemsize
    lead = 1
    for d in shape[:-2]:
        lead *= d
    sub = _round_up(shape[-2], sub_mult)
    lane = _round_up(shape[-1], 128)
    return lead * sub * lane * itemsize


def _discriminator_kernel(x_ref, w1_ref, b1_ref, w2_ref, b2_ref,
                          w3_ref, b3_ref, o_ref, *, alpha, io_dtype):
    """One (input_dim, TN) batch-on-lanes tile -> (out_dim, TN) log-prob tile.

    Everything is transposed so the batch rides the lane (last) axis:
        h_{l+1}^T = LeakyReLU( W_l @ h_l^T + b_l ),   W_l stored (out, in)
    which keeps every DMA and store lane-dense and makes the softmax a purely
    per-column (VPU/EUP) operation.
    """

    def leaky_relu(v):
        return jnp.where(v >= 0, v, alpha * v)

    def dense(h, w_ref, b_ref):
        # MXU matmul with f32 accumulation; bias + activation in f32 on the VPU.
        acc = jnp.dot(w_ref[...], h, preferred_element_type=jnp.float32)
        return leaky_relu(acc + b_ref[...].astype(jnp.float32))

    # Per-tile cast (rides free VPU slots under the DMA); no wrapper-side pass.
    h = x_ref[...].astype(io_dtype)
    h = dense(h, w1_ref, b1_ref)
    h = dense(h.astype(io_dtype), w2_ref, b2_ref)
    h = dense(h.astype(io_dtype), w3_ref, b3_ref)          # (out_dim, TN) f32

    out_dim = o_ref.shape[0]
    if out_dim == 2:
        # Closed-form 2-class log_softmax (no cross-sublane reduce):
        #   out0 = -softplus(h1 - h0)
        #   out1 = -softplus(h0 - h1) = d - softplus(d),  d = h1 - h0
        d = h[1:2, :] - h[0:1, :]
        sp = jnp.maximum(d, 0.0) + jnp.log(1.0 + jnp.exp(-jnp.abs(d)))
        o_ref[0:1, :] = (-sp).astype(o_ref.dtype)
        o_ref[1:2, :] = (d - sp).astype(o_ref.dtype)
    else:
        # General per-column (axis=0) numerically-stable log_softmax.
        m = jnp.max(h, axis=0, keepdims=True)
        z = h - m
        lse = jnp.log(jnp.sum(jnp.exp(z), axis=0, keepdims=True))
        o_ref[...] = (z - lse).astype(o_ref.dtype)


def discriminator_forward(x, params, *, alpha=0.2, io_dtype=jnp.float32,
                          max_tile_n=8192):
    """x: (batch, input_dim) float.

    params: dict of w1,b1,w2,b2,w3,b3 in PyTorch nn.Linear layout:
    W_l of shape (out_features, in_features), b_l of shape (out_features, 1).
    Returns (batch, output_dim) float32 log-probabilities.
    """
    batch, input_dim = x.shape
    w1, w2, w3 = (params[k].astype(io_dtype) for k in ("w1", "w2", "w3"))
    b1, b2, b3 = (params[k].astype(jnp.float32) for k in ("b1", "b2", "b3"))
    hid1, hid2, out_dim = w1.shape[0], w2.shape[0], w3.shape[0]
    assert w1.shape[1] == input_dim

    # Lane-dense presentation: batch on the lane (last) axis.  The transpose is
    # cheap layout plumbing over a (batch, input_dim=10) array; a production
    # caller can keep activations in this layout and skip it entirely.
    x_t = x.T                                    # (input_dim, batch), native dtype

    # Batch tile on the lane axis: as large as sensible (multiple of 128), but
    # >= 2 grid steps whenever the batch allows (v7x megacore: 2 TensorCores).
    padded_b = _round_up(batch, 128)
    if batch <= 128:
        tn = batch                               # single full block
    else:
        tn = min(max_tile_n, padded_b)
        if pl.cdiv(padded_b, tn) < 2:
            tn = _round_up(pl.cdiv(padded_b, 2), 128)
    grid = (pl.cdiv(batch, tn),)                 # ragged last block: Pallas masks it

    def resident(arr):
        # Full-array block, same block index every grid step -> stays in VMEM.
        # (pl.Buffered(1) would drop the redundant double buffer, but the bytes
        #  are negligible here, so keep the default for maximum compatibility.)
        return pl.BlockSpec(arr.shape, lambda i: (0, 0))

    # VMEM budget from (sublane, lane)-padded tile sizes (double buffering
    # included), capped well under v7x's 64 MiB physical / 32 MiB scoped VMEM.
    tile_bytes = 2 * (_vmem_padded_bytes((input_dim, tn), x.dtype)
                      + _vmem_padded_bytes((out_dim, tn), jnp.float32))
    weight_bytes = 2 * sum(_vmem_padded_bytes(a.shape, a.dtype)
                           for a in (w1, b1, w2, b2, w3, b3))
    interm_bytes = 2 * sum(_vmem_padded_bytes((h, tn), jnp.float32)
                           for h in (hid1, hid2, out_dim))
    vmem_limit = min(max(tile_bytes + weight_bytes + interm_bytes + (4 << 20),
                         8 << 20),
                     32 << 20)

    hbm_weight_bytes = sum(_vmem_padded_bytes(a.shape, a.dtype)
                           for a in (w1, b1, w2, b2, w3, b3))
    cost = pl.CostEstimate(
        flops=2 * batch * (input_dim * hid1 + hid1 * hid2 + hid2 * out_dim),
        transcendentals=batch * out_dim,
        bytes_accessed=_vmem_padded_bytes((input_dim, batch), x.dtype)
        + _vmem_padded_bytes((out_dim, batch), jnp.float32)
        + hbm_weight_bytes,
    )

    kernel = functools.partial(_discriminator_kernel, alpha=alpha,
                               io_dtype=jnp.dtype(io_dtype))

    out_t = pl.pallas_call(
        kernel,
        out_shape=jax.ShapeDtypeStruct((out_dim, batch), jnp.float32),
        grid=grid,
        in_specs=[
            pl.BlockSpec((input_dim, tn), lambda i: (0, i)),   # x^T tile
            resident(w1), resident(b1),
            resident(w2), resident(b2),
            resident(w3), resident(b3),
        ],
        out_specs=pl.BlockSpec((out_dim, tn), lambda i: (0, i)),
        compiler_params=pltpu.CompilerParams(
            dimension_semantics=("parallel",),
            vmem_limit_bytes=int(vmem_limit),
        ),
        cost_estimate=cost,
    )(x_t, w1, b1, w2, b2, w3, b3)

    return out_t.T                               # (batch, out_dim) f32 log-probs


def init_discriminator_params(key, input_dim=10, output_dim=2):
    """Deterministic synthetic init matching nn.Linear layout (W stored (out, in))."""
    hid1 = input_dim * 2
    hid2 = input_dim // 2 if input_dim >= 2 else input_dim

    def linear_init(k, fan_in, fan_out):
        kw, kb = jax.random.split(k)
        bound = 1.0 / jnp.sqrt(jnp.float32(fan_in))
        w = jax.random.uniform(kw, (fan_out, fan_in), jnp.float32, -bound, bound)
        b = jax.random.uniform(kb, (fan_out, 1), jnp.float32, -bound, bound)
        return w, b

    k1, k2, k3 = jax.random.split(key, 3)
    w1, b1 = linear_init(k1, input_dim, hid1)
    w2, b2 = linear_init(k2, hid1, hid2)
    w3, b3 = linear_init(k3, hid2, output_dim)
    return {"w1": w1, "b1": b1, "w2": w2, "b2": b2, "w3": w3, "b3": b3}


def _reference_forward(x, params, alpha=0.2):
    """Pure-JAX f32 reference (batch-major, PyTorch-equivalent) for correctness."""
    def leaky(v):
        return jnp.where(v >= 0, v, alpha * v)
    h = leaky(x @ params["w1"].T + params["b1"][:, 0])
    h = leaky(h @ params["w2"].T + params["b2"][:, 0])
    h = leaky(h @ params["w3"].T + params["b3"][:, 0])
    return jax.nn.log_softmax(h, axis=1)


if __name__ == "__main__":
    key = jax.random.PRNGKey(0)
    k_params, k_x1, k_x2 = jax.random.split(key, 3)

    input_dim, output_dim = 10, 2
    params = init_discriminator_params(k_params, input_dim, output_dim)

    # --- small batch, f32 I/O: near-exact check vs pure-JAX reference ------
    batch = 8
    x = jax.random.normal(k_x1, (batch, input_dim), dtype=jnp.float32)
    out_small = jax.block_until_ready(
        discriminator_forward(x, params, alpha=0.2, io_dtype=jnp.float32))
    ref_small = _reference_forward(x, params, alpha=0.2)
    assert out_small.shape == (batch, output_dim)
    assert jnp.allclose(out_small, ref_small, atol=1e-4, rtol=1e-4), \
        "f32 mismatch vs reference (small batch)"

    # --- larger ragged batch: multi-step grid + Pallas-masked last block ---
    batch_big = 2050                 # padded 2176 -> tn=1152, grid=(2,)
    xb = jax.random.normal(k_x2, (batch_big, input_dim), dtype=jnp.float32)
    out_big = jax.block_until_ready(
        discriminator_forward(xb, params, alpha=0.2, io_dtype=jnp.float32))
    ref_big = _reference_forward(xb, params, alpha=0.2)
    assert out_big.shape == (batch_big, output_dim)
    assert jnp.allclose(out_big, ref_big, atol=1e-4, rtol=1e-4), \
        "f32 mismatch vs reference (big batch)"

    # --- bf16 matmul path (in-kernel cast), loose tolerance ----------------
    out_bf16 = jax.block_until_ready(
        discriminator_forward(xb, params, alpha=0.2, io_dtype=jnp.bfloat16))
    assert out_bf16.shape == (batch_big, output_dim)
    assert jnp.allclose(out_bf16, ref_big, atol=2e-2, rtol=2e-2), \
        "bf16 mismatch vs reference"

    print("KERNEL_OK")
</pallas_src>

<mosaic_0001>
module attributes {stable_mosaic.version = 11 : i64} {
  func.func @_discriminator_kernel(%arg0: i32, %arg1: memref<10x8xf32, #tpu.memory_space<vmem>>, %arg2: memref<20x10xf32, #tpu.memory_space<vmem>>, %arg3: memref<20x1xf32, #tpu.memory_space<vmem>>, %arg4: memref<5x20xf32, #tpu.memory_space<vmem>>, %arg5: memref<5x1xf32, #tpu.memory_space<vmem>>, %arg6: memref<2x5xf32, #tpu.memory_space<vmem>>, %arg7: memref<2x1xf32, #tpu.memory_space<vmem>>, %arg8: memref<2x8xf32, #tpu.memory_space<vmem>>) attributes {dimension_semantics = [#tpu.dimension_semantics<parallel>], iteration_bounds = array<i64: 1>, scalar_prefetch = 0 : i64, scratch_operands = 0 : i64, tpu.core_type = #tpu.core_type<tc>, window_params = [{transform_indices = @transform_0, window_bounds = array<i64: 10, 8>}, {pipeline_mode = #tpu.pipeline_mode<synchronous>, transform_indices = @transform_1, window_bounds = array<i64: 20, 10>}, {pipeline_mode = #tpu.pipeline_mode<synchronous>, transform_indices = @transform_2, window_bounds = array<i64: 20, 1>}, {pipeline_mode = #tpu.pipeline_mode<synchronous>, transform_indices = @transform_3, window_bounds = array<i64: 5, 20>}, {pipeline_mode = #tpu.pipeline_mode<synchronous>, transform_indices = @transform_4, window_bounds = array<i64: 5, 1>}, {pipeline_mode = #tpu.pipeline_mode<synchronous>, transform_indices = @transform_5, window_bounds = array<i64: 2, 5>}, {pipeline_mode = #tpu.pipeline_mode<synchronous>, transform_indices = @transform_6, window_bounds = array<i64: 2, 1>}, {transform_indices = @transform_7, window_bounds = array<i64: 2, 8>}]} {
    %c0 = arith.constant 0 : index
    %c0_0 = arith.constant 0 : index
    %0 = vector.load %arg1[%c0, %c0_0] : memref<10x8xf32, #tpu.memory_space<vmem>>, vector<10x8xf32>
    %c0_1 = arith.constant 0 : index
    %c0_2 = arith.constant 0 : index
    %1 = vector.load %arg2[%c0_1, %c0_2] : memref<20x10xf32, #tpu.memory_space<vmem>>, vector<20x10xf32>
    %cst = arith.constant dense<0.000000e+00> : vector<20x8xf32>
    %2 = tpu.matmul %1, %0, %cst {dimension_numbers = #tpu.dot_dimension_numbers<[1], [0], [0], [1], [0, 0, 1, 1], [], []>} : vector<20x10xf32>, vector<10x8xf32>, vector<20x8xf32> -> vector<20x8xf32>
    %c0_3 = arith.constant 0 : index
    %c0_4 = arith.constant 0 : index
    %3 = vector.load %arg3[%c0_3, %c0_4] : memref<20x1xf32, #tpu.memory_space<vmem>>, vector<20x1xf32>
    %4 = vector.broadcast %3 : vector<20x1xf32> to vector<20x8xf32>
    %5 = arith.addf %2, %4 : vector<20x8xf32>
    %cst_5 = arith.constant 0.000000e+00 : f32
    %6 = vector.broadcast %cst_5 : f32 to vector<20x8xf32>
    %7 = arith.cmpf oge, %5, %6 : vector<20x8xf32>
    %cst_6 = arith.constant 2.000000e-01 : f32
    %8 = vector.broadcast %cst_6 : f32 to vector<20x8xf32>
    %9 = arith.mulf %8, %5 : vector<20x8xf32>
    %10 = arith.select %7, %5, %9 : vector<20x8xi1>, vector<20x8xf32>
    %c0_7 = arith.constant 0 : index
    %c0_8 = arith.constant 0 : index
    %11 = vector.load %arg4[%c0_7, %c0_8] : memref<5x20xf32, #tpu.memory_space<vmem>>, vector<5x20xf32>
    %cst_9 = arith.constant dense<0.000000e+00> : vector<5x8xf32>
    %12 = tpu.matmul %11, %10, %cst_9 {dimension_numbers = #tpu.dot_dimension_numbers<[1], [0], [0], [1], [0, 0, 1, 1], [], []>} : vector<5x20xf32>, vector<20x8xf32>, vector<5x8xf32> -> vector<5x8xf32>
    %c0_10 = arith.constant 0 : index
    %c0_11 = arith.constant 0 : index
    %13 = vector.load %arg5[%c0_10, %c0_11] : memref<5x1xf32, #tpu.memory_space<vmem>>, vector<5x1xf32>
    %14 = vector.broadcast %13 : vector<5x1xf32> to vector<5x8xf32>
    %15 = arith.addf %12, %14 : vector<5x8xf32>
    %cst_12 = arith.constant 0.000000e+00 : f32
    %16 = vector.broadcast %cst_12 : f32 to vector<5x8xf32>
    %17 = arith.cmpf oge, %15, %16 : vector<5x8xf32>
    %cst_13 = arith.constant 2.000000e-01 : f32
    %18 = vector.broadcast %cst_13 : f32 to vector<5x8xf32>
    %19 = arith.mulf %18, %15 : vector<5x8xf32>
    %20 = arith.select %17, %15, %19 : vector<5x8xi1>, vector<5x8xf32>
    %c0_14 = arith.constant 0 : index
    %c0_15 = arith.constant 0 : index
    %21 = vector.load %arg6[%c0_14, %c0_15] : memref<2x5xf32, #tpu.memory_space<vmem>>, vector<2x5xf32>
    %cst_16 = arith.constant dense<0.000000e+00> : vector<2x8xf32>
    %22 = tpu.matmul %21, %20, %cst_16 {dimension_numbers = #tpu.dot_dimension_numbers<[1], [0], [0], [1], [0, 0, 1, 1], [], []>} : vector<2x5xf32>, vector<5x8xf32>, vector<2x8xf32> -> vector<2x8xf32>
    %c0_17 = arith.constant 0 : index
    %c0_18 = arith.constant 0 : index
    %23 = vector.load %arg7[%c0_17, %c0_18] : memref<2x1xf32, #tpu.memory_space<vmem>>, vector<2x1xf32>
    %24 = vector.broadcast %23 : vector<2x1xf32> to vector<2x8xf32>
    %25 = arith.addf %22, %24 : vector<2x8xf32>
    %cst_19 = arith.constant 0.000000e+00 : f32
    %26 = vector.broadcast %cst_19 : f32 to vector<2x8xf32>
    %27 = arith.cmpf oge, %25, %26 : vector<2x8xf32>
    %cst_20 = arith.constant 2.000000e-01 : f32
    %28 = vector.broadcast %cst_20 : f32 to vector<2x8xf32>
    %29 = arith.mulf %28, %25 : vector<2x8xf32>
    %30 = arith.select %27, %25, %29 : vector<2x8xi1>, vector<2x8xf32>
    %31 = vector.extract_strided_slice %30 {offsets = [1, 0], sizes = [1, 8], strides = [1, 1]} : vector<2x8xf32> to vector<1x8xf32>
    %32 = vector.extract_strided_slice %30 {offsets = [0, 0], sizes = [1, 8], strides = [1, 1]} : vector<2x8xf32> to vector<1x8xf32>
    %33 = arith.subf %31, %32 : vector<1x8xf32>
    %cst_21 = arith.constant 0.000000e+00 : f32
    %34 = vector.broadcast %cst_21 : f32 to vector<1x8xf32>
    %35 = arith.maximumf %33, %34 : vector<1x8xf32>
    %36 = math.absf %33 : vector<1x8xf32>
    %cst_22 = arith.constant 0.000000e+00 : f32
    %37 = vector.broadcast %cst_22 : f32 to vector<1x8xf32>
    %38 = arith.subf %37, %36 : vector<1x8xf32>
    %39 = math.exp %38 : vector<1x8xf32>
    %cst_23 = arith.constant 1.000000e+00 : f32
    %40 = vector.broadcast %cst_23 : f32 to vector<1x8xf32>
    %41 = arith.addf %40, %39 : vector<1x8xf32>
    %42 = math.log %41 : vector<1x8xf32>
    %43 = arith.addf %35, %42 : vector<1x8xf32>
    %cst_24 = arith.constant 0.000000e+00 : f32
    %44 = vector.broadcast %cst_24 : f32 to vector<1x8xf32>
    %45 = arith.subf %44, %43 : vector<1x8xf32>
    %c0_25 = arith.constant 0 : index
    %c0_26 = arith.constant 0 : index
    %46 = vector.load %arg8[%c0_25, %c0_26] : memref<2x8xf32, #tpu.memory_space<vmem>>, vector<1x8xf32>
    tpu.vector_store %arg8[%c0_25, %c0_26], %45 {strides = array<i32>} : memref<2x8xf32, #tpu.memory_space<vmem>>, vector<1x8xf32>,
    %47 = arith.subf %33, %43 : vector<1x8xf32>
    %c1 = arith.constant 1 : index
    %c0_27 = arith.constant 0 : index
    %48 = vector.load %arg8[%c1, %c0_27] : memref<2x8xf32, #tpu.memory_space<vmem>>, vector<1x8xf32>
    tpu.vector_store %arg8[%c1, %c0_27], %47 {strides = array<i32>} : memref<2x8xf32, #tpu.memory_space<vmem>>, vector<1x8xf32>,
    return
  }
  func.func @transform_0(%arg0: i32) -> (i32, i32) {
    %c0_i32 = arith.constant 0 : i32
    %c0_i32_0 = arith.constant 0 : i32
    return %c0_i32, %arg0 : i32, i32
  }
  func.func @transform_1(%arg0: i32) -> (i32, i32) {
    %c0_i32 = arith.constant 0 : i32
    %c0_i32_0 = arith.constant 0 : i32
    %c0_i32_1 = arith.constant 0 : i32
    return %c0_i32, %c0_i32_0 : i32, i32
  }
  func.func @transform_2(%arg0: i32) -> (i32, i32) {
    %c0_i32 = arith.constant 0 : i32
    %c0_i32_0 = arith.constant 0 : i32
    %c0_i32_1 = arith.constant 0 : i32
    return %c0_i32, %c0_i32_0 : i32, i32
  }
  func.func @transform_3(%arg0: i32) -> (i32, i32) {
    %c0_i32 = arith.constant 0 : i32
    %c0_i32_0 = arith.constant 0 : i32
    %c0_i32_1 = arith.constant 0 : i32
    return %c0_i32, %c0_i32_0 : i32, i32
  }
  func.func @transform_4(%arg0: i32) -> (i32, i32) {
    %c0_i32 = arith.constant 0 : i32
    %c0_i32_0 = arith.constant 0 : i32
    %c0_i32_1 = arith.constant 0 : i32
    return %c0_i32, %c0_i32_0 : i32, i32
  }
  func.func @transform_5(%arg0: i32) -> (i32, i32) {
    %c0_i32 = arith.constant 0 : i32
    %c0_i32_0 = arith.constant 0 : i32
    %c0_i32_1 = arith.constant 0 : i32
    return %c0_i32, %c0_i32_0 : i32, i32
  }
  func.func @transform_6(%arg0: i32) -> (i32, i32) {
    %c0_i32 = arith.constant 0 : i32
    %c0_i32_0 = arith.constant 0 : i32
    %c0_i32_1 = arith.constant 0 : i32
    return %c0_i32, %c0_i32_0 : i32, i32
  }
  func.func @transform_7(%arg0: i32) -> (i32, i32) {
    %c0_i32 = arith.constant 0 : i32
    %c0_i32_0 = arith.constant 0 : i32
    return %c0_i32, %arg0 : i32, i32
  }
}

</mosaic_0001>

<llo_original>
// kernel: tpu_custom_call.1
$region0: #{tpu_custom_call.1}
  #allocation0 [shape = 'u32[]', space=smem, size = 0x4, offset = 0x4, fixed_abs, tag = 'smem constant byte address 0x4 - core index']
  #allocation1 [shape = 'u32[144,128]{1,0:T(1,128)}', space=vmem, size = 0x12000, scoped, tag = 'internal scratch']
  %s0 = inlined_call_operand.vmem [shape: f32[10,8], index: 0, kind: input, shape index: {}]
  %s1 = inlined_call_operand.vmem [shape: f32[20,10], index: 1, kind: input, shape index: {}]
  %s2 = inlined_call_operand.vmem [shape: f32[20,1], index: 2, kind: input, shape index: {}]
  %s3 = inlined_call_operand.vmem [shape: f32[5,20], index: 3, kind: input, shape index: {}]
  %s4 = inlined_call_operand.vmem [shape: f32[5,1], index: 4, kind: input, shape index: {}]
  %s5 = inlined_call_operand.vmem [shape: f32[2,5], index: 5, kind: input, shape index: {}]
  %s6 = inlined_call_operand.vmem [shape: f32[2,1], index: 6, kind: input, shape index: {}]
  %s7 = inlined_call_operand.hbm [shape: f32[2,8], index: 7, kind: output, shape index: {}]
  %s8 = sld [smem:[#allocation0]]
  $region38: #{tpu_custom_call.1} parent=0
    _
  %s10 = ssub.s32 1, %s8
  %s11 = scalar_select 0, %s10, %s8
  $region1: #{tpu_custom_call.1} parent=0
    #allocation2 [shape = 'u8[1024]{0}', space=vmem, size = 0x400, scoped, tag = 'output window, operand 0, single buffered']
    #allocation3 [shape = 's32[1]{0}', space=sflag, size = 0x4, scoped, tag = 'scoped memory for tpu_custom_call.1']
    %12 = vsyncpa [#allocation3], 0
    // Predicated region
    $region2: #{tpu_custom_call.1} parent=1 // pred_check
      _
    $region3: #{tpu_custom_call.1} parent=1 // pred_check_branch
      %14 = sbr.rel (0) target = $region5
    $region4: #{tpu_custom_call.1} parent=1 // pred_region
      _
    $region5: #{tpu_custom_call.1} parent=1 // pred_fallthru
      _
    // Predicated region
    $region6: #{tpu_custom_call.1} parent=1 // pred_check
      _
    $region7: #{tpu_custom_call.1} parent=1 // pred_check_branch
      %16 = sbr.rel (0) target = $region9
    $region8: #{tpu_custom_call.1} parent=1 // pred_region
      _
    $region9: #{tpu_custom_call.1} parent=1 // pred_fallthru
      _
    // Predicated region
    $region10: #{tpu_custom_call.1} parent=1 // pred_check
      _
    $region11: #{tpu_custom_call.1} parent=1 // pred_check_branch
      %18 = sbr.rel (0) target = $region13
    $region12: #{tpu_custom_call.1} parent=1 // pred_region
      _
    $region13: #{tpu_custom_call.1} parent=1 // pred_fallthru
      _
    // Predicated region
    $region14: #{tpu_custom_call.1} parent=1 // pred_check
      _
    $region15: #{tpu_custom_call.1} parent=1 // pred_check_branch
      %20 = sbr.rel (0) target = $region17
    $region16: #{tpu_custom_call.1} parent=1 // pred_region
      _
    $region17: #{tpu_custom_call.1} parent=1 // pred_fallthru
      _
    // Predicated region
    $region18: #{tpu_custom_call.1} parent=1 // pred_check
      _
    $region19: #{tpu_custom_call.1} parent=1 // pred_check_branch
      %22 = sbr.rel (0) target = $region21
    $region20: #{tpu_custom_call.1} parent=1 // pred_region
      _
    $region21: #{tpu_custom_call.1} parent=1 // pred_fallthru
      _
    // Predicated region
    $region22: #{tpu_custom_call.1} parent=1 // pred_check
      _
    $region23: #{tpu_custom_call.1} parent=1 // pred_check_branch
      %24 = sbr.rel (0) target = $region25
    $region24: #{tpu_custom_call.1} parent=1 // pred_region
      _
    $region25: #{tpu_custom_call.1} parent=1 // pred_fallthru
      _
    // Predicated region
    $region26: #{tpu_custom_call.1} parent=1 // pred_check
      _
    $region27: #{tpu_custom_call.1} parent=1 // pred_check_branch
      %26 = sbr.rel (0) target = $region29
    $region28: #{tpu_custom_call.1} parent=1 // pred_region
      _
    $region29: #{tpu_custom_call.1} parent=1 // pred_fallthru
      _
    %v27 = vld [vmem:[%s0] sm:$0xff]
    %v28 = vld [vmem:[%s0 + $0x8] sm:$0x3]
    %v29 = vld [vmem:[%s1] sm:$0xff]
    %v30 = vld [vmem:[%s1 + $0x8] sm:$0xff]
    %v31 = vld [vmem:[%s1 + $0x10] sm:$0xf]
    %v32 = vld [vmem:[%s2] sm:$0xff]
    %v33 = vld [vmem:[%s2 + $0x8] sm:$0xff]
    %v34 = vld [vmem:[%s2 + $0x10] sm:$0xf]
    %36 = vset.pattern.permute.xlu0 0
    %37 = vperm.xlu0 %36, %v32
    %v38 = vpop.permute.xlu0 %37
    %41 = vset.pattern.permute.xlu0 0
    %42 = vperm.xlu0 %41, %v33
    %v43 = vpop.permute.xlu0 %42
    %46 = vset.pattern.permute.xlu0 0
    %47 = vperm.xlu0 %46, %v34
    %v48 = vpop.permute.xlu0 %47
    %vm50 = vcmask 80896
    %v52 = vsel %vm50, %v29, 0
    %v55 = vsel %vm50, %v30, 0
    %v58 = vsel %vm50, %v31, 0
    %vm60 = vcmask 1041408
    %v62 = vsel %vm60, %v28, 0
    %64 = vmatprep.subr.mxu0 0.0
    %65 = vmatpush1.msra.mxu0 %v27
    %66 = vmatprep.subr.mxu0 0.0
    %67 = vmatpush1.msra.mxu0 %v62
    %68 = vmatprep.subr.mxu0 0.0
    %69 = vmatpush1.msra.mxu0 0.0
    %70 = vmatprep.subr.mxu0 0.0
    %71 = vmatpush1.msra.mxu0 0.0
    %72 = vmatprep.subr.mxu0 0.0
    %73 = vmatpush1.msra.mxu0 0.0
    %74 = vmatprep.subr.mxu0 0.0
    %75 = vmatpush1.msra.mxu0 0.0
    %76 = vmatprep.subr.mxu0 0.0
    %77 = vmatpush1.msra.mxu0 0.0
    %78 = vmatprep.subr.mxu0 0.0
    %79 = vmatpush1.msra.mxu0 0.0
    %80 = vmatprep.subr.mxu0 0.0
    %81 = vmatpush1.msra.mxu0 0.0
    %82 = vmatprep.subr.mxu0 0.0
    %83 = vmatpush1.msra.mxu0 0.0
    %84 = vmatprep.subr.mxu0 0.0
    %85 = vmatpush1.msra.mxu0 0.0
    %86 = vmatprep.subr.mxu0 0.0
    %87 = vmatpush1.msra.mxu0 0.0
    %88 = vmatprep.subr.mxu0 0.0
    %89 = vmatpush1.msra.mxu0 0.0
    %90 = vmatprep.subr.mxu0 0.0
    %91 = vmatpush1.msra.mxu0 0.0
    %92 = vmatprep.subr.mxu0 0.0
    %93 = vmatpush1.msra.mxu0 0.0
    %94 = vmatprep.subr.mxu0 0.0
    %95 = vmatpush1.msra.mxu0 0.0
    %96 = vmatprep.subr.mxu0 0.0
    %97 = vmatpush1.msra.mxu0 0.0
    %98 = vmatprep.subr.mxu0 0.0
    %99 = vmatpush1.msra.mxu0 0.0
    %100 = vmatprep.subr.mxu0 0.0
    %101 = vmatpush1.msra.mxu0 0.0
    %102 = vmatprep.subr.mxu0 0.0
    %103 = vmatpush1.msra.mxu0 0.0
    %104 = vmatprep.subr.mxu0 0.0
    %105 = vmatpush1.msra.mxu0 0.0
    %106 = vmatprep.subr.mxu0 0.0
    %107 = vmatpush1.msra.mxu0 0.0
    %108 = vmatprep.subr.mxu0 0.0
    %109 = vmatpush1.msra.mxu0 0.0
    %110 = vmatprep.subr.mxu0 0.0
    %111 = vmatpush1.msra.mxu0 0.0
    %112 = vmatprep.subr.mxu0 0.0
    %113 = vmatpush1.msra.mxu0 0.0
    %114 = vmatprep.subr.mxu0 0.0
    %115 = vmatpush1.msra.mxu0 0.0
    %116 = vmatprep.subr.mxu0 0.0
    %117 = vmatpush1.msra.mxu0 0.0
    %118 = vmatprep.subr.mxu0 0.0
    %119 = vmatpush1.msra.mxu0 0.0
    %120 = vmatprep.subr.mxu0 0.0
    %121 = vmatpush1.msra.mxu0 0.0
    %122 = vmatprep.subr.mxu0 0.0
    %123 = vmatpush1.msra.mxu0 0.0
    %124 = vmatprep.subr.mxu0 0.0
    %125 = vmatpush1.msra.mxu0 0.0
    %126 = vmatprep.subr.mxu0 0.0
    %127 = vmatpush1.msra.mxu0 0.0
    %128 = vmatprep.mubr.f32.mxu0 0.0
    %129 = vmatmul.mubr.f32.gmra.mrb[0].mxu0 %v52
    %v130 = vpop.f32.mrb[0].mxu0
    %v131 = vadd.f32 %v38, %v130
    %v132 = vpop.f32.mrb[0].mxu0
    %133 = vmatprep.mubr.f32.mxu0 0.0
    %134 = vmatmul.mubr.f32.gmra.mrb[0].mxu0 %v55
    %v135 = vpop.f32.mrb[0].mxu0
    %v136 = vadd.f32 %v43, %v135
    %v137 = vpop.f32.mrb[0].mxu0
    %138 = vmatprep.mubr.f32.mxu0 0.0
    %139 = vmatmul.mubr.f32.gmra.mrb[0].mxu0 %v58
    %v140 = vpop.f32.mrb[0].mxu0
    %v141 = vadd.f32 %v48, %v140
    %v142 = vpop.f32.mrb[0].mxu0
    %143 = vdwg.mxu0
    %vm144 = vcmp.ge.f32.partialorder %v131, 0.0
    %vm145 = vcmp.ge.f32.partialorder %v136, 0.0
    %vm146 = vcmp.ge.f32.partialorder %v141, 0.0
    %v147 = vmul.f32 %v131, 0.2
    %v148 = vmul.f32 %v136, 0.2
    %v149 = vmul.f32 %v141, 0.2
    %v150 = vsel %vm144, %v131, %v147
    %v151 = vsel %vm145, %v136, %v148
    %v152 = vsel %vm146, %v141, %v149
    %v153 = vld [vmem:[%s3] sm:$0x1f]
    %v154 = vld [vmem:[%s4] sm:$0x1f]
    %156 = vset.pattern.permute.xlu0 0
    %157 = vperm.xlu0 %156, %v154
    %v158 = vpop.permute.xlu0 %157
    %vm160 = vcmask 162816
    %v162 = vsel %vm160, %v153, 0
    %vm164 = vcmask 1043456
    %v166 = vsel %vm164, %v152, 0
    %168 = vmatprep.subr.mxu0 0.0
    %169 = vmatpush1.msra.mxu0 %v150
    %170 = vmatprep.subr.mxu0 0.0
    %171 = vmatpush1.msra.mxu0 %v151
    %172 = vmatprep.subr.mxu0 0.0
    %173 = vmatpush1.msra.mxu0 %v166
    %174 = vmatprep.subr.mxu0 0.0
    %175 = vmatpush1.msra.mxu0 0.0
    %176 = vmatprep.subr.mxu0 0.0
    %177 = vmatpush1.msra.mxu0 0.0
    %178 = vmatprep.subr.mxu0 0.0
    %179 = vmatpush1.msra.mxu0 0.0
    %180 = vmatprep.subr.mxu0 0.0
    %181 = vmatpush1.msra.mxu0 0.0
    %182 = vmatprep.subr.mxu0 0.0
    %183 = vmatpush1.msra.mxu0 0.0
    %184 = vmatprep.subr.mxu0 0.0
    %185 = vmatpush1.msra.mxu0 0.0
    %186 = vmatprep.subr.mxu0 0.0
    %187 = vmatpush1.msra.mxu0 0.0
    %188 = vmatprep.subr.mxu0 0.0
    %189 = vmatpush1.msra.mxu0 0.0
    %190 = vmatprep.subr.mxu0 0.0
    %191 = vmatpush1.msra.mxu0 0.0
    %192 = vmatprep.subr.mxu0 0.0
    %193 = vmatpush1.msra.mxu0 0.0
    %194 = vmatprep.subr.mxu0 0.0
    %195 = vmatpush1.msra.mxu0 0.0
    %196 = vmatprep.subr.mxu0 0.0
    %197 = vmatpush1.msra.mxu0 0.0
    %198 = vmatprep.subr.mxu0 0.0
    %199 = vmatpush1.msra.mxu0 0.0
    %200 = vmatprep.subr.mxu0 0.0
    %201 = vmatpush1.msra.mxu0 0.0
    %202 = vmatprep.subr.mxu0 0.0
    %203 = vmatpush1.msra.mxu0 0.0
    %204 = vmatprep.subr.mxu0 0.0
    %205 = vmatpush1.msra.mxu0 0.0
    %206 = vmatprep.subr.mxu0 0.0
    %207 = vmatpush1.msra.mxu0 0.0
    %208 = vmatprep.subr.mxu0 0.0
    %209 = vmatpush1.msra.mxu0 0.0
    %210 = vmatprep.subr.mxu0 0.0
    %211 = vmatpush1.msra.mxu0 0.0
    %212 = vmatprep.subr.mxu0 0.0
    %213 = vmatpush1.msra.mxu0 0.0
    %214 = vmatprep.subr.mxu0 0.0
    %215 = vmatpush1.msra.mxu0 0.0
    %216 = vmatprep.subr.mxu0 0.0
    %217 = vmatpush1.msra.mxu0 0.0
    %218 = vmatprep.subr.mxu0 0.0
    %219 = vmatpush1.msra.mxu0 0.0
    %220 = vmatprep.subr.mxu0 0.0
    %221 = vmatpush1.msra.mxu0 0.0
    %222 = vmatprep.subr.mxu0 0.0
    %223 = vmatpush1.msra.mxu0 0.0
    %224 = vmatprep.subr.mxu0 0.0
    %225 = vmatpush1.msra.mxu0 0.0
    %226 = vmatprep.subr.mxu0 0.0
    %227 = vmatpush1.msra.mxu0 0.0
    %228 = vmatprep.subr.mxu0 0.0
    %229 = vmatpush1.msra.mxu0 0.0
    %230 = vmatprep.subr.mxu0 0.0
    %231 = vmatpush1.msra.mxu0 0.0
    %232 = vmatprep.mubr.f32.mxu0 0.0
    %233 = vmatmul.mubr.f32.gmra.mrb[0].mxu0 %v162
    %v234 = vpop.f32.mrb[0].mxu0
    %v235 = vadd.f32 %v158, %v234
    %v236 = vpop.f32.mrb[0].mxu0
    %237 = vdwg.mxu0
    %vm238 = vcmp.ge.f32.partialorder %v235, 0.0
    %v239 = vmul.f32 %v235, 0.2
    %v240 = vsel %vm238, %v235, %v239
    %v241 = vld [vmem:[%s5] sm:$0x3]
    %v242 = vld [vmem:[%s6] sm:$0x3]
    %244 = vset.pattern.permute.xlu0 0
    %245 = vperm.xlu0 %244, %v242
    %v246 = vpop.permute.xlu0 %245
    %vm248 = vcmask 39936
    %v250 = vsel %vm248, %v241, 0
    %vm252 = vcmask 1044480
    %v254 = vsel %vm252, %v240, 0
    %256 = vmatprep.subr.mxu0 0.0
    %257 = vmatpush1.msra.mxu0 %v254
    %258 = vmatprep.subr.mxu0 0.0
    %259 = vmatpush1.msra.mxu0 0.0
    %260 = vmatprep.subr.mxu0 0.0
    %261 = vmatpush1.msra.mxu0 0.0
    %262 = vmatprep.subr.mxu0 0.0
    %263 = vmatpush1.msra.mxu0 0.0
    %264 = vmatprep.subr.mxu0 0.0
    %265 = vmatpush1.msra.mxu0 0.0
    %266 = vmatprep.subr.mxu0 0.0
    %267 = vmatpush1.msra.mxu0 0.0
    %268 = vmatprep.subr.mxu0 0.0
    %269 = vmatpush1.msra.mxu0 0.0
    %270 = vmatprep.subr.mxu0 0.0
    %271 = vmatpush1.msra.mxu0 0.0
    %272 = vmatprep.subr.mxu0 0.0
    %273 = vmatpush1.msra.mxu0 0.0
    %274 = vmatprep.subr.mxu0 0.0
    %275 = vmatpush1.msra.mxu0 0.0
    %276 = vmatprep.subr.mxu0 0.0
    %277 = vmatpush1.msra.mxu0 0.0
    %278 = vmatprep.subr.mxu0 0.0
    %279 = vmatpush1.msra.mxu0 0.0
    %280 = vmatprep.subr.mxu0 0.0
    %281 = vmatpush1.msra.mxu0 0.0
    %282 = vmatprep.subr.mxu0 0.0
    %283 = vmatpush1.msra.mxu0 0.0
    %284 = vmatprep.subr.mxu0 0.0
    %285 = vmatpush1.msra.mxu0 0.0
    %286 = vmatprep.subr.mxu0 0.0
    %287 = vmatpush1.msra.mxu0 0.0
    %288 = vmatprep.subr.mxu0 0.0
    %289 = vmatpush1.msra.mxu0 0.0
    %290 = vmatprep.subr.mxu0 0.0
    %291 = vmatpush1.msra.mxu0 0.0
    %292 = vmatprep.subr.mxu0 0.0
    %293 = vmatpush1.msra.mxu0 0.0
    %294 = vmatprep.subr.mxu0 0.0
    %295 = vmatpush1.msra.mxu0 0.0
    %296 = vmatprep.subr.mxu0 0.0
    %297 = vmatpush1.msra.mxu0 0.0
    %298 = vmatprep.subr.mxu0 0.0
    %299 = vmatpush1.msra.mxu0 0.0
    %300 = vmatprep.subr.mxu0 0.0
    %301 = vmatpush1.msra.mxu0 0.0
    %302 = vmatprep.subr.mxu0 0.0
    %303 = vmatpush1.msra.mxu0 0.0
    %304 = vmatprep.subr.mxu0 0.0
    %305 = vmatpush1.msra.mxu0 0.0
    %306 = vmatprep.subr.mxu0 0.0
    %307 = vmatpush1.msra.mxu0 0.0
    %308 = vmatprep.subr.mxu0 0.0
    %309 = vmatpush1.msra.mxu0 0.0
    %310 = vmatprep.subr.mxu0 0.0
    %311 = vmatpush1.msra.mxu0 0.0
    %312 = vmatprep.subr.mxu0 0.0
    %313 = vmatpush1.msra.mxu0 0.0
    %314 = vmatprep.subr.mxu0 0.0
    %315 = vmatpush1.msra.mxu0 0.0
    %316 = vmatprep.subr.mxu0 0.0
    %317 = vmatpush1.msra.mxu0 0.0
    %318 = vmatprep.subr.mxu0 0.0
    %319 = vmatpush1.msra.mxu0 0.0
    %320 = vmatprep.mubr.f32.mxu0 0.0
    %321 = vmatmul.mubr.f32.gmra.mrb[0].mxu0 %v250
    %v322 = vpop.f32.mrb[0].mxu0
    %v323 = vadd.f32 %v246, %v322
    %v324 = vpop.f32.mrb[0].mxu0
    %325 = vdwg.mxu0
    %vm326 = vcmp.ge.f32.partialorder %v323, 0.0
    %v327 = vmul.f32 %v323, 0.2
    %v328 = vsel %vm326, %v323, %v327
    %v330 = vrot.slane %v328, 7
    %v332 = vsub.f32 %v328, %v330
    %v333 = vmax.f32 %v332, 0.0
    %v334 = vand.u32 2147483647, %v332
    %v335 = vsub.f32 0.0, %v334
    %v336 = vmul.f32 %v335, 1.442695
    %v337 = vpow.pop %v336
    %v338 = vadd.f32 %v337, 1.0
    %v339 = vlog2.pop %v338
    %v340 = vmul.f32 %v339, 0.6931472
    %v341 = vadd.f32 %v333, %v340
    %v342 = vsub.f32 0.0, %v341
    %vm343 = vcmask 58369
    %344 = vst.msk [vmem:[#allocation2 - $0x1] sm:$0x2] %vm343, %v342
    %v345 = vsub.f32 %v332, %v341
    %346 = vst.msk [vmem:[#allocation2] sm:$0x2] %vm343, %v345
    // Predicated region
    $region30: #{tpu_custom_call.1} parent=1 // pred_check
      _
    $region31: #{tpu_custom_call.1} parent=1 // pred_check_branch
      %348 = sbr.rel (0) target = $region33
    $region32: #{tpu_custom_call.1} parent=1 // pred_region
      %s350 = ssub.s32 32, 32
      %351 = vsyncadd [#allocation3], %s350
      %s353 = sshll.u32 [#allocation2], 4
      %s354 = int_to_ptr.vmem [resolvable:$true] %s353
      %356 = dma.vmem_to_hbm [thread:$0]  %s354, 32, %s7, [#allocation3]
    $region33: #{tpu_custom_call.1} parent=1 // pred_fallthru
      _
    // Predicated region
    $region34: #{tpu_custom_call.1} parent=1 // pred_check
      _
    $region35: #{tpu_custom_call.1} parent=1 // pred_check_branch
      %358 = sbr.rel (0) target = $region37
    $region36: #{tpu_custom_call.1} parent=1 // pred_region
      %359 = dma.done [#allocation3], 32
    $region37: #{tpu_custom_call.1} parent=1 // pred_fallthru
      _
    %360 = vsyncpa [#allocation3], 1

</llo_original>
